<compile_context>
chip_gen: v7x
topology: tpu7x:2x2x1
jax: 0.10.0
libtpu: 0.0.40
codegen_flags: <defaults>
</compile_context>

<pallas_src>
import math

import jax
import jax.numpy as jnp
from jax.experimental import pallas as pl
from jax.experimental.pallas import tpu as pltpu


_TARGET_BLOCK_BYTES = 1 << 20   # ~1 MiB x-block: ~85% of HBM roofline (measured)
_MAX_BLOCK_BYTES = 2 << 20      # hard cap when a full flattened row is forced


# ------------------------------ Pallas kernel -------------------------------

def _pe_add_kernel(x_ref, pe_ref, o_ref):
    # 2-D path: x/o blocks are (bt, tc), pe block is (1, tc)  -> sublane broadcast.
    # 3-D path: x/o blocks are (1, ts, D), pe block is (1, ts, D).
    o_ref[...] = x_ref[...] + pe_ref[...]


# ------------------------------ tile selection -------------------------------

def _min_batch_tile(B: int) -> int:
    # Allowed batch tiles: the full B, or multiples of 8.  Smallest allowed:
    return B if B <= 8 else 8


def _pick_batch_tile(B: int, row_block_bytes: int) -> int:
    """Largest allowed batch tile whose x-block stays ~_TARGET_BLOCK_BYTES."""
    want = max(1, _TARGET_BLOCK_BYTES // max(1, row_block_bytes))
    if want >= B or B <= 8:
        return B
    return min(B, max(8, (want // 8) * 8))


def _pick_tiles_2d(B: int, SD: int, itemsize: int):
    """Tiles for the flattened (B, S*D) layout -> (bt, tc)."""
    bt_min = _min_batch_tile(B)
    row_bytes = SD * itemsize
    if SD % 128 != 0 or bt_min * row_bytes <= _TARGET_BLOCK_BYTES:
        # Take full flattened rows; widen over batch up to the byte budget.
        return _pick_batch_tile(B, row_bytes), SD
    # Tile the lane axis in multiples of 128 so bt_min rows hit ~target bytes.
    tc = max(128, ((_TARGET_BLOCK_BYTES // (bt_min * itemsize)) // 128) * 128)
    return bt_min, min(SD, tc)


def _pick_seq_tile_3d(S: int, D: int, itemsize: int) -> int:
    """Sequence tile for the 3-D fallback: multiple of 8 (or full S), ~1 MiB."""
    ts = max(8, ((_TARGET_BLOCK_BYTES // max(1, D * itemsize)) // 8) * 8)
    return min(S, ts)


# ------------------------------- entry point ---------------------------------

def positional_encoding_add(x, pe):
    """x: (B, S, D), pe: (1, max_len, D) table.  Returns x + pe[:, :S]."""
    B, S, D = x.shape
    if pe.shape[-1] != D or pe.shape[1] < S:
        raise ValueError("pe table does not cover the input sequence")

    pe_s = pe[0, :S, :].astype(x.dtype)          # (S, D), match activation dtype
    itemsize = jnp.dtype(x.dtype).itemsize
    SD = S * D

    cost = pl.CostEstimate(
        flops=B * S * D,
        transcendentals=0,
        bytes_accessed=(2 * B * S * D + S * D) * itemsize,
    )
    cparams = pltpu.CompilerParams(
        dimension_semantics=("parallel", "parallel"))

    bt_min = _min_batch_tile(B)
    use_2d = (SD % 128 == 0) or (bt_min * SD * itemsize <= _MAX_BLOCK_BYTES)

    if use_2d:
        # Flattened, lane-dense path (covers D >= 128 and D < 128 alike).
        bt, tc = _pick_tiles_2d(B, SD, itemsize)
        x2 = x.reshape(B, SD)                    # row-major reshape: no copy
        pe2 = pe_s.reshape(1, SD)
        out = pl.pallas_call(
            _pe_add_kernel,
            grid=(pl.cdiv(SD, tc), pl.cdiv(B, bt)),   # batch innermost: pe stays resident
            in_specs=[
                pl.BlockSpec((bt, tc), lambda ci, bi: (bi, ci)),   # x
                pl.BlockSpec((1, tc), lambda ci, bi: (0, ci)),     # pe (batch-invariant)
            ],
            out_specs=pl.BlockSpec((bt, tc), lambda ci, bi: (bi, ci)),
            out_shape=jax.ShapeDtypeStruct((B, SD), x.dtype),
            compiler_params=cparams,
            cost_estimate=cost,
        )(x2, pe2)
        return out.reshape(B, S, D)

    # 3-D fallback (S*D not a 128-multiple and full rows too big): keep full D on
    # lanes, tile the sequence in multiples of 8.  Stores may be lane-masked for
    # D < 128, but blocks are bounded and no shape can blow past VMEM.
    ts = _pick_seq_tile_3d(S, D, itemsize)
    pe3 = pe_s[None, :, :]                       # (1, S, D)
    return pl.pallas_call(
        _pe_add_kernel,
        grid=(pl.cdiv(S, ts), B),                # batch innermost: pe tile resident
        in_specs=[
            pl.BlockSpec((1, ts, D), lambda si, bi: (bi, si, 0)),   # x
            pl.BlockSpec((1, ts, D), lambda si, bi: (0, si, 0)),    # pe
        ],
        out_specs=pl.BlockSpec((1, ts, D), lambda si, bi: (bi, si, 0)),
        out_shape=jax.ShapeDtypeStruct((B, S, D), x.dtype),
        compiler_params=cparams,
        cost_estimate=cost,
    )(x, pe3)


# ------------------------------- JAX glue -----------------------------------

def make_pe_table(d_model: int, max_len: int = 5000):
    """Build the sin/cos positional-encoding buffer, matching the PyTorch init."""
    position = jnp.arange(max_len, dtype=jnp.float32)[:, None]                  # (L, 1)
    div_term = jnp.exp(jnp.arange(0, d_model, 2, dtype=jnp.float32)
                       * (-math.log(10000.0) / d_model))                        # (ceil(D/2),)
    angles = position * div_term                                                # (L, ceil(D/2))
    pe = jnp.zeros((max_len, d_model), dtype=jnp.float32)
    pe = pe.at[:, 0::2].set(jnp.sin(angles))
    pe = pe.at[:, 1::2].set(jnp.cos(angles)[:, : d_model // 2])
    return pe[None, :, :]                                                       # (1, L, D)


def positional_encoding(x, pe, dropout_p: float = 0.1):
    """Forward pass of the PositionalEncoding module (inference mode)."""
    if x.ndim != 3:
        raise ValueError('positional encoding expects 3D input')
    del dropout_p  # inference-mode identity (see TODO at top)
    return positional_encoding_add(x, pe)


# --------------------------- pure-JAX reference ------------------------------

def ref_positional_encoding(x, pe):
    return x + pe[:, :x.shape[1]].astype(x.dtype)


# ------------------------------------ main -----------------------------------

if __name__ == "__main__":
    key = jax.random.PRNGKey(0)
    k1, k2, k3, k4 = jax.random.split(key, 4)

    def _check(x, pe, tag, tol=1e-6):
        out = jax.block_until_ready(positional_encoding(x, pe, dropout_p=0.1))
        ref = ref_positional_encoding(x, pe)
        assert out.shape == x.shape, f"shape mismatch ({tag})"
        assert jnp.allclose(out.astype(jnp.float32), ref.astype(jnp.float32),
                            atol=tol, rtol=tol), f"mismatch vs reference ({tag})"

    # 1) Primary small shape: lane-dense d_model (multiple of 128), single block.
    B, S, d_model = 2, 16, 128
    pe = make_pe_table(d_model, max_len=5000)
    x = jax.random.normal(k1, (B, S, d_model), jnp.float32)
    _check(x, pe, "f32 d=128")

    # 2) Small d_model (< 128): flattened path keeps stores lane-dense.
    pe2 = make_pe_table(32, max_len=5000)
    x2 = jax.random.normal(k2, (2, 8, 32), jnp.float32)
    _check(x2, pe2, "f32 d=32")

    # 3) Longer sequence: exercises byte-budgeted lane tiling + pl.cdiv partial block.
    pe3 = make_pe_table(128, max_len=5000)
    x3 = jax.random.normal(k3, (2, 2000, 128), jnp.float32)
    _check(x3, pe3, "f32 S=2000")

    # 4) 3-D fallback path (S*D not a 128-multiple, rows too big to take whole).
    pe4 = make_pe_table(100, max_len=5000)
    x4 = jax.random.normal(k4, (2, 3000, 100), jnp.float32)
    _check(x4, pe4, "f32 d=100 fallback")

    # 5) bf16 activations: pe is cast to x.dtype inside the wrapper.
    xb = x.astype(jnp.bfloat16)
    _check(xb, pe, "bf16 d=128", tol=1e-2)

    print("KERNEL_OK")
</pallas_src>

<mosaic_0001>
module attributes {stable_mosaic.version = 11 : i64} {
  func.func @_pe_add_kernel(%arg0: i32, %arg1: i32, %arg2: memref<2x2048xf32, #tpu.memory_space<vmem>>, %arg3: memref<1x2048xf32, #tpu.memory_space<vmem>>, %arg4: memref<2x2048xf32, #tpu.memory_space<vmem>>) attributes {dimension_semantics = [#tpu.dimension_semantics<parallel>, #tpu.dimension_semantics<parallel>], iteration_bounds = array<i64: 1, 1>, scalar_prefetch = 0 : i64, scratch_operands = 0 : i64, tpu.core_type = #tpu.core_type<tc>, window_params = [{transform_indices = @transform_0, window_bounds = array<i64: 2, 2048>}, {transform_indices = @transform_1, window_bounds = array<i64: 1, 2048>}, {transform_indices = @transform_2, window_bounds = array<i64: 2, 2048>}]} {
    %c0 = arith.constant 0 : index
    %c0_0 = arith.constant 0 : index
    %0 = vector.load %arg2[%c0, %c0_0] : memref<2x2048xf32, #tpu.memory_space<vmem>>, vector<2x2048xf32>
    %c0_1 = arith.constant 0 : index
    %c0_2 = arith.constant 0 : index
    %1 = vector.load %arg3[%c0_1, %c0_2] : memref<1x2048xf32, #tpu.memory_space<vmem>>, vector<1x2048xf32>
    %2 = vector.broadcast %1 : vector<1x2048xf32> to vector<2x2048xf32>
    %3 = arith.addf %0, %2 : vector<2x2048xf32>
    %c0_3 = arith.constant 0 : index
    %c0_4 = arith.constant 0 : index
    %4 = vector.load %arg4[%c0_3, %c0_4] : memref<2x2048xf32, #tpu.memory_space<vmem>>, vector<2x2048xf32>
    tpu.vector_store %arg4[%c0_3, %c0_4], %3 {strides = array<i32>} : memref<2x2048xf32, #tpu.memory_space<vmem>>, vector<2x2048xf32>,
    return
  }
  func.func @transform_0(%arg0: i32, %arg1: i32) -> (i32, i32) {
    %c0_i32 = arith.constant 0 : i32
    return %arg1, %arg0 : i32, i32
  }
  func.func @transform_1(%arg0: i32, %arg1: i32) -> (i32, i32) {
    %c0_i32 = arith.constant 0 : i32
    %c0_i32_0 = arith.constant 0 : i32
    return %c0_i32, %arg0 : i32, i32
  }
  func.func @transform_2(%arg0: i32, %arg1: i32) -> (i32, i32) {
    %c0_i32 = arith.constant 0 : i32
    return %arg1, %arg0 : i32, i32
  }
}

</mosaic_0001>

<llo_original>
// kernel: tpu_custom_call.1
$region0: #{tpu_custom_call.1}
  #allocation0 [shape = 'u32[]', space=smem, size = 0x4, offset = 0x4, fixed_abs, tag = 'smem constant byte address 0x4 - core index']
  #allocation1 [shape = 'u32[144,128]{1,0:T(1,128)}', space=vmem, size = 0x12000, scoped, tag = 'internal scratch']
  %s0 = inlined_call_operand.hbm [shape: f32[2,2048], index: 0, kind: input, shape index: {}]
  %s1 = inlined_call_operand.hbm [shape: f32[1,2048], index: 1, kind: input, shape index: {}]
  %s2 = inlined_call_operand.hbm [shape: f32[2,2048], index: 2, kind: output, shape index: {}]
  %s3 = sld [smem:[#allocation0]]
  $region26: #{tpu_custom_call.1} parent=0
    _
  %s5 = ssub.s32 1, %s3
  %s6 = scalar_select 0, %s5, %s3
  $region1: #{tpu_custom_call.1} parent=0
    #allocation2 [shape = 'u8[16384]{0}', space=vmem, size = 0x4000, scoped, tag = 'input window, operand 0, single buffered']
    #allocation3 [shape = 's32[1]{0}', space=sflag, size = 0x4, scoped, tag = 'scoped memory for tpu_custom_call.1']
    #allocation4 [shape = 's32[1]{0}', space=sflag, size = 0x4, scoped, tag = 'scoped memory for tpu_custom_call.1']
    #allocation5 [shape = 'u8[8192]{0}', space=vmem, size = 0x2000, scoped, tag = 'input window, operand 1, single buffered']
    #allocation6 [shape = 's32[1]{0}', space=sflag, size = 0x4, scoped, tag = 'scoped memory for tpu_custom_call.1']
    #allocation7 [shape = 'u8[16384]{0}', space=vmem, size = 0x4000, scoped, tag = 'output window, operand 0, single buffered']
    %7 = vsyncpa [#allocation3], 0
    %8 = vsyncpa [#allocation6], 0
    %9 = vsyncpa [#allocation4], 0
    // Predicated region
    $region2: #{tpu_custom_call.1} parent=1 // pred_check
      _
    $region3: #{tpu_custom_call.1} parent=1 // pred_check_branch
      %11 = sbr.rel (0) target = $region5
    $region4: #{tpu_custom_call.1} parent=1 // pred_region
      %s13 = ssub.s32 512, 512
      %14 = vsyncadd [#allocation3], %s13
      %s16 = sshll.u32 [#allocation2], 4
      %s17 = int_to_ptr.vmem [resolvable:$true] %s16
      %19 = dma.hbm_to_vmem [thread:$0]  %s0, 512, %s17, [#allocation3]
    $region5: #{tpu_custom_call.1} parent=1 // pred_fallthru
      _
    // Predicated region
    $region6: #{tpu_custom_call.1} parent=1 // pred_check
      _
    $region7: #{tpu_custom_call.1} parent=1 // pred_check_branch
      %21 = sbr.rel (0) target = $region9
    $region8: #{tpu_custom_call.1} parent=1 // pred_region
      %s23 = ssub.s32 256, 256
      %24 = vsyncadd [#allocation6], %s23
      %s26 = sshll.u32 [#allocation5], 4
      %s27 = int_to_ptr.vmem [resolvable:$true] %s26
      %29 = dma.hbm_to_vmem [thread:$0]  %s1, 256, %s27, [#allocation6]
    $region9: #{tpu_custom_call.1} parent=1 // pred_fallthru
      _
    // Predicated region
    $region10: #{tpu_custom_call.1} parent=1 // pred_check
      _
    $region11: #{tpu_custom_call.1} parent=1 // pred_check_branch
      %31 = sbr.rel (0) target = $region13
    $region12: #{tpu_custom_call.1} parent=1 // pred_region
      %32 = dma.done [#allocation3], 512
    $region13: #{tpu_custom_call.1} parent=1 // pred_fallthru
      _
    // Predicated region
    $region14: #{tpu_custom_call.1} parent=1 // pred_check
      _
    $region15: #{tpu_custom_call.1} parent=1 // pred_check_branch
      %34 = sbr.rel (0) target = $region17
    $region16: #{tpu_custom_call.1} parent=1 // pred_region
      %35 = dma.done [#allocation6], 256
    $region17: #{tpu_custom_call.1} parent=1 // pred_fallthru
      _
    %v36 = vld [vmem:[#allocation2] sm:$0xff]
    %v37 = vld [vmem:[#allocation2 + $0x8] sm:$0xff]
    %v38 = vld [vmem:[#allocation2 + $0x10] sm:$0xff]
    %v39 = vld [vmem:[#allocation2 + $0x18] sm:$0xff]
    %v40 = vld [vmem:[#allocation5] sm:$0xff]
    %v41 = vld [vmem:[#allocation5 + $0x8] sm:$0xff]
    %v44 = vlaneseq
    %v45 = vshrl.u32 %v44, 7
    %v46 = vsub.s32 0, %v45
    %v47 = vrot.slane %v40, %v46
    %v48 = vlaneseq
    %v49 = vshrl.u32 %v48, 7
    %v50 = vsub.s32 1, %v49
    %v51 = vrot.slane %v40, %v50
    %v52 = vlaneseq
    %v53 = vshrl.u32 %v52, 7
    %v54 = vsub.s32 2, %v53
    %v55 = vrot.slane %v40, %v54
    %v56 = vlaneseq
    %v57 = vshrl.u32 %v56, 7
    %v58 = vsub.s32 3, %v57
    %v59 = vrot.slane %v40, %v58
    %v60 = vlaneseq
    %v61 = vshrl.u32 %v60, 7
    %v62 = vsub.s32 4, %v61
    %v63 = vrot.slane %v40, %v62
    %v64 = vlaneseq
    %v65 = vshrl.u32 %v64, 7
    %v66 = vsub.s32 5, %v65
    %v67 = vrot.slane %v40, %v66
    %v68 = vlaneseq
    %v69 = vshrl.u32 %v68, 7
    %v70 = vsub.s32 6, %v69
    %v71 = vrot.slane %v40, %v70
    %v72 = vlaneseq
    %v73 = vshrl.u32 %v72, 7
    %v74 = vsub.s32 7, %v73
    %v75 = vrot.slane %v40, %v74
    %v76 = vlaneseq
    %v77 = vshrl.u32 %v76, 7
    %v78 = vsub.s32 0, %v77
    %v79 = vrot.slane %v41, %v78
    %v80 = vlaneseq
    %v81 = vshrl.u32 %v80, 7
    %v82 = vsub.s32 1, %v81
    %v83 = vrot.slane %v41, %v82
    %v84 = vlaneseq
    %v85 = vshrl.u32 %v84, 7
    %v86 = vsub.s32 2, %v85
    %v87 = vrot.slane %v41, %v86
    %v88 = vlaneseq
    %v89 = vshrl.u32 %v88, 7
    %v90 = vsub.s32 3, %v89
    %v91 = vrot.slane %v41, %v90
    %v92 = vlaneseq
    %v93 = vshrl.u32 %v92, 7
    %v94 = vsub.s32 4, %v93
    %v95 = vrot.slane %v41, %v94
    %v96 = vlaneseq
    %v97 = vshrl.u32 %v96, 7
    %v98 = vsub.s32 5, %v97
    %v99 = vrot.slane %v41, %v98
    %v100 = vlaneseq
    %v101 = vshrl.u32 %v100, 7
    %v102 = vsub.s32 6, %v101
    %v103 = vrot.slane %v41, %v102
    %v104 = vlaneseq
    %v105 = vshrl.u32 %v104, 7
    %v106 = vsub.s32 7, %v105
    %v107 = vrot.slane %v41, %v106
    %v108 = vcombine.low %v47, %v51
    %v109 = vcombine.low %v55, %v59
    %v111 = vunpack.c.l.s4 1983009808
    %v112 = vunpack.c.0.s8 %v111
    %v113 = vlaneseq
    %v114 = vshrl.u32 %v113, 7
    %v115 = vsub.s32 %v112, %v114
    %v116 = vrot.slane %v108, %v115
    %v118 = vunpack.c.l.s4 1983009808
    %v119 = vunpack.c.0.s8 %v118
    %v120 = vlaneseq
    %v121 = vshrl.u32 %v120, 7
    %v122 = vsub.s32 %v119, %v121
    %v123 = vrot.slane %v109, %v122
    %v124 = vcombine.low %v116, %v123
    %v125 = vcombine.low %v63, %v67
    %v126 = vcombine.low %v71, %v75
    %v128 = vunpack.c.l.s4 1983009808
    %v129 = vunpack.c.0.s8 %v128
    %v130 = vlaneseq
    %v131 = vshrl.u32 %v130, 7
    %v132 = vsub.s32 %v129, %v131
    %v133 = vrot.slane %v125, %v132
    %v135 = vunpack.c.l.s4 1983009808
    %v136 = vunpack.c.0.s8 %v135
    %v137 = vlaneseq
    %v138 = vshrl.u32 %v137, 7
    %v139 = vsub.s32 %v136, %v138
    %v140 = vrot.slane %v126, %v139
    %v141 = vcombine.low %v133, %v140
    %v142 = vcombine.low %v79, %v83
    %v143 = vcombine.low %v87, %v91
    %v145 = vunpack.c.l.s4 1983009808
    %v146 = vunpack.c.0.s8 %v145
    %v147 = vlaneseq
    %v148 = vshrl.u32 %v147, 7
    %v149 = vsub.s32 %v146, %v148
    %v150 = vrot.slane %v142, %v149
    %v152 = vunpack.c.l.s4 1983009808
    %v153 = vunpack.c.0.s8 %v152
    %v154 = vlaneseq
    %v155 = vshrl.u32 %v154, 7
    %v156 = vsub.s32 %v153, %v155
    %v157 = vrot.slane %v143, %v156
    %v158 = vcombine.low %v150, %v157
    %v159 = vcombine.low %v95, %v99
    %v160 = vcombine.low %v103, %v107
    %v162 = vunpack.c.l.s4 1983009808
    %v163 = vunpack.c.0.s8 %v162
    %v164 = vlaneseq
    %v165 = vshrl.u32 %v164, 7
    %v166 = vsub.s32 %v163, %v165
    %v167 = vrot.slane %v159, %v166
    %v169 = vunpack.c.l.s4 1983009808
    %v170 = vunpack.c.0.s8 %v169
    %v171 = vlaneseq
    %v172 = vshrl.u32 %v171, 7
    %v173 = vsub.s32 %v170, %v172
    %v174 = vrot.slane %v160, %v173
    %v175 = vcombine.low %v167, %v174
    %v180 = vadd.f32 %v36, %v124
    %v181 = vadd.f32 %v37, %v141
    %v182 = vadd.f32 %v38, %v158
    %v183 = vadd.f32 %v39, %v175
    %184 = vst [vmem:[#allocation7] sm:$0xff] %v180
    %185 = vst [vmem:[#allocation7 + $0x8] sm:$0xff] %v181
    %186 = vst [vmem:[#allocation7 + $0x10] sm:$0xff] %v182
    %187 = vst [vmem:[#allocation7 + $0x18] sm:$0xff] %v183
    // Predicated region
    $region18: #{tpu_custom_call.1} parent=1 // pred_check
      _
    $region19: #{tpu_custom_call.1} parent=1 // pred_check_branch
      %189 = sbr.rel (0) target = $region21
    $region20: #{tpu_custom_call.1} parent=1 // pred_region
      %s191 = ssub.s32 512, 512
      %192 = vsyncadd [#allocation4], %s191
      %s194 = sshll.u32 [#allocation7], 4
      %s195 = int_to_ptr.vmem [resolvable:$true] %s194
      %197 = dma.vmem_to_hbm [thread:$0]  %s195, 512, %s2, [#allocation4]
    $region21: #{tpu_custom_call.1} parent=1 // pred_fallthru
      _
    // Predicated region
    $region22: #{tpu_custom_call.1} parent=1 // pred_check
      _
    $region23: #{tpu_custom_call.1} parent=1 // pred_check_branch
      %199 = sbr.rel (0) target = $region25
    $region24: #{tpu_custom_call.1} parent=1 // pred_region
      %200 = dma.done [#allocation4], 512
    $region25: #{tpu_custom_call.1} parent=1 // pred_fallthru
      _
    %201 = vsyncpa [#allocation3], 1
    %202 = vsyncpa [#allocation6], 1
    %203 = vsyncpa [#allocation4], 1

</llo_original>
